<compile_context>
chip_gen: v6e
topology: v6e:2x2x1
jax: 0.10.0
libtpu: 0.0.40
codegen_flags: <defaults>
</compile_context>

<pallas_src>
import functools

import jax
import jax.numpy as jnp
from jax.experimental import pallas as pl
from jax.experimental.pallas import tpu as pltpu

LANES = 128              # lane width (last dim)
SUBLANES = 8             # sublane multiple
CHUNK_ROWS = 1024        # in-kernel compute granularity (512 KiB f32)
MAX_TILE_ROWS = 8192     # per-grid-step DMA block: 4 MiB f32 per input
VMEM_LIMIT_BYTES = 32 * 1024 * 1024


def _num_tensorcore_splits():
    """2 splits only on 2-TensorCore chips (v7x); 1 on v5e/v6e/unknown."""
    try:
        kind = jax.devices()[0].device_kind.lower()
    except Exception:
        return 1
    if "v7" in kind or "7x" in kind:
        return 2
    return 1


def _dice_kernel(pred_ref, tgt_ref, out_ref, *, n_valid, tile_rows, chunk_rows,
                 inner_t, rt, last_needs_mask, has_dup):
    """Accumulates per-lane partial sums of (p*t, p, t) into the resident
    (1, 3, 8, 128) output block for this split."""
    s = pl.program_id(0)
    i = pl.program_id(1)
    blk = s * inner_t + i
    n_chunks = tile_rows // chunk_rows
    k = chunk_rows // SUBLANES

    @pl.when(i == 0)
    def _():
        out_ref[...] = jnp.zeros_like(out_ref)

    def accum_chunk(c, mask):
        if n_chunks == 1:
            p_raw = pred_ref[...]
            t_raw = tgt_ref[...]
        else:
            start = pl.multiple_of(c * chunk_rows, chunk_rows)
            p_raw = pred_ref[pl.ds(start, chunk_rows), :]
            t_raw = tgt_ref[pl.ds(start, chunk_rows), :]
        p = jax.nn.sigmoid(p_raw.astype(jnp.float32))
        t = t_raw.astype(jnp.float32)
        if mask is not None:
            p = jnp.where(mask, p, 0.0)
            t = jnp.where(mask, t, 0.0)
        # Reduce (chunk_rows, 128) -> (8, 128): layout-preserving reshape plus
        # pure vreg adds (VPU); no cross-lane XLU reduce in the hot loop.
        out_ref[0, 0, :, :] += (p * t).reshape(k, SUBLANES, LANES).sum(axis=0)
        out_ref[0, 1, :, :] += p.reshape(k, SUBLANES, LANES).sum(axis=0)
        out_ref[0, 2, :, :] += t.reshape(k, SUBLANES, LANES).sum(axis=0)

    def run_unmasked():
        if n_chunks == 1:
            accum_chunk(0, None)
        else:
            @pl.loop(0, n_chunks)
            def _(c):
                accum_chunk(c, None)

    def run_masked():
        full_rows = n_valid // LANES
        rem = n_valid % LANES

        def chunk_mask(c):
            row0 = blk * tile_rows + c * chunk_rows
            row_ids = row0 + jax.lax.broadcasted_iota(
                jnp.int32, (chunk_rows, LANES), 0)
            if rem == 0:
                return row_ids < full_rows
            lane_ids = jax.lax.broadcasted_iota(
                jnp.int32, (chunk_rows, LANES), 1)
            return (row_ids < full_rows) | (
                (row_ids == full_rows) & (lane_ids < rem))

        if n_chunks == 1:
            accum_chunk(0, chunk_mask(0))
        else:
            @pl.loop(0, n_chunks)
            def _(c):
                accum_chunk(c, chunk_mask(c))

    if not (last_needs_mask or has_dup):
        # Every block is fully valid: steady-state mask-free path only.
        run_unmasked()
    else:
        n_unmasked = rt - 1 if last_needs_mask else rt
        if n_unmasked > 0:
            @pl.when(blk < n_unmasked)
            def _():
                run_unmasked()
        if last_needs_mask:
            @pl.when(blk == rt - 1)
            def _():
                run_masked()
        # blk >= rt: clamped duplicate block -> skip (never double-counts).


def dice_loss(pred_logits, target, smooth=1.0):
    # flatten exactly like torch .view(-1); keep native dtypes (cast in-kernel)
    p = pred_logits.reshape(-1)
    t = target.reshape(-1)
    if t.dtype == jnp.bool_:
        # narrow dtype on the wire: 1 B/elem HBM traffic, f32 cast in-kernel
        t = t.astype(jnp.int8)
    n = p.shape[0]

    # Round the flat length up to a multiple of 8*128 so the reshape to
    # (rows, 128) with rows % 8 == 0 is free.  The pad (a copy) only happens
    # when n is not already a multiple of 1024; padded values are excluded by
    # the in-kernel element-index mask on the edge block.
    unit = SUBLANES * LANES
    padded = ((n + unit - 1) // unit) * unit
    if padded != n:
        p = jnp.pad(p, (0, padded - n))
        t = jnp.pad(t, (0, padded - n))
    rows = padded // LANES
    p2 = p.reshape(rows, LANES)
    t2 = t.reshape(rows, LANES)

    # DMA block size: large (up to 8192 rows, multiple of CHUNK_ROWS) so the
    # per-step overhead is amortized; the kernel chunks compute internally.
    if rows >= CHUNK_ROWS:
        tile_rows = min(MAX_TILE_ROWS, (rows // CHUNK_ROWS) * CHUNK_ROWS)
        chunk_rows = CHUNK_ROWS
    else:
        tile_rows = rows          # full array = single (small) block
        chunk_rows = rows

    rt = (rows + tile_rows - 1) // tile_rows       # number of real row-tiles
    num_splits = _num_tensorcore_splits()
    if rt < num_splits:
        num_splits = 1
    inner_t = (rt + num_splits - 1) // num_splits

    has_dup = num_splits * inner_t > rt            # clamped duplicate blocks?
    last_needs_mask = (rt * tile_rows * LANES) != n

    def in_map(s, i):
        blk = s * inner_t + i
        # clamp blocks past the real end; their accumulation is skipped
        return (jnp.minimum(blk, rt - 1), 0)

    partials = pl.pallas_call(
        functools.partial(
            _dice_kernel, n_valid=n, tile_rows=tile_rows,
            chunk_rows=chunk_rows, inner_t=inner_t, rt=rt,
            last_needs_mask=last_needs_mask, has_dup=has_dup),
        out_shape=jax.ShapeDtypeStruct(
            (num_splits, 3, SUBLANES, LANES), jnp.float32),
        grid_spec=pltpu.PrefetchScalarGridSpec(
            num_scalar_prefetch=0,
            grid=(num_splits, inner_t),
            in_specs=[
                pl.BlockSpec((tile_rows, LANES), in_map),
                pl.BlockSpec((tile_rows, LANES), in_map),
            ],
            out_specs=pl.BlockSpec(
                (1, 3, SUBLANES, LANES), lambda s, i: (s, 0, 0, 0)),
        ),
        compiler_params=pltpu.CompilerParams(
            dimension_semantics=("parallel", "arbitrary"),
            vmem_limit_bytes=VMEM_LIMIT_BYTES),
    )(p2, t2)

    # Tiny cross-split / cross-lane reduction + dice math in plain JAX.
    inter = jnp.sum(partials[:, 0])
    psum = jnp.sum(partials[:, 1])
    tsum = jnp.sum(partials[:, 2])
    dice = (2.0 * inter + smooth) / (psum + tsum + smooth)
    return 1.0 - dice


def _reference_dice_loss(pred_logits, target, smooth=1.0):
    p = jax.nn.sigmoid(pred_logits.astype(jnp.float32)).reshape(-1)
    t = target.astype(jnp.float32).reshape(-1)
    inter = jnp.sum(p * t)
    dice = (2.0 * inter + smooth) / (jnp.sum(p) + jnp.sum(t) + smooth)
    return 1.0 - dice


if __name__ == "__main__":
    key = jax.random.PRNGKey(0)
    k1, k2, k3, k4 = jax.random.split(key, 4)

    # 1) small NCHW-like shapes consistent with a segmentation loss
    pred_logits = jax.random.normal(k1, (2, 4, 16, 16), dtype=jnp.float32)
    target = (jax.random.uniform(k2, (2, 4, 16, 16)) > 0.5).astype(jnp.float32)
    loss = jax.block_until_ready(dice_loss(pred_logits, target, smooth=1.0))
    ref = _reference_dice_loss(pred_logits, target, smooth=1.0)
    assert jnp.allclose(loss, ref, atol=1e-5, rtol=1e-5), (loss, ref)

    # 2) ragged shape exercising pad, multi-block grid, chunk loop, edge mask
    #    and the bool->int8 narrow-target path.
    pred2 = jax.random.normal(k3, (2, 5, 173, 181), dtype=jnp.float32)
    targ2 = jax.random.uniform(k4, (2, 5, 173, 181)) > 0.5        # bool
    loss2 = jax.block_until_ready(dice_loss(pred2, targ2, smooth=1.0))
    ref2 = _reference_dice_loss(pred2, targ2, smooth=1.0)
    assert jnp.allclose(loss2, ref2, atol=1e-5, rtol=1e-5), (loss2, ref2)

    print("KERNEL_OK")
</pallas_src>

<mosaic_0001>
module attributes {stable_mosaic.version = 11 : i64} {
  func.func @_dice_kernel(%arg0: i32, %arg1: i32, %arg2: memref<16x128xf32, #tpu.memory_space<vmem>>, %arg3: memref<16x128xf32, #tpu.memory_space<vmem>>, %arg4: memref<1x3x8x128xf32, #tpu.memory_space<vmem>>) attributes {dimension_semantics = [#tpu.dimension_semantics<parallel>, #tpu.dimension_semantics<arbitrary>], iteration_bounds = array<i64: 1, 1>, scalar_prefetch = 0 : i64, scratch_operands = 0 : i64, tpu.core_type = #tpu.core_type<tc>, window_params = [{transform_indices = @transform_0, window_bounds = array<i64: 16, 128>}, {transform_indices = @transform_1, window_bounds = array<i64: 16, 128>}, {transform_indices = @transform_2, window_bounds = array<i64: 1, 3, 8, 128>}]} {
    %c0_i32 = arith.constant 0 : i32
    %0 = arith.cmpi eq, %arg1, %c0_i32 : i32
    %1 = arith.extui %0 : i1 to i32
    %c0_i32_0 = arith.constant 0 : i32
    %2 = arith.cmpi ne, %1, %c0_i32_0 : i32
    scf.if %2 {
      %cst_29 = arith.constant 0.000000e+00 : f32
      %35 = vector.broadcast %cst_29 : f32 to vector<1x3x8x128xf32>
      %c0_30 = arith.constant 0 : index
      %c0_31 = arith.constant 0 : index
      %c0_32 = arith.constant 0 : index
      %c0_33 = arith.constant 0 : index
      %36 = vector.load %arg4[%c0_30, %c0_31, %c0_32, %c0_33] : memref<1x3x8x128xf32, #tpu.memory_space<vmem>>, vector<1x3x8x128xf32>
      tpu.vector_store %arg4[%c0_30, %c0_31, %c0_32, %c0_33], %35 {strides = array<i32>} : memref<1x3x8x128xf32, #tpu.memory_space<vmem>>, vector<1x3x8x128xf32>,
    } else {
    }
    %c0 = arith.constant 0 : index
    %c0_1 = arith.constant 0 : index
    %3 = vector.load %arg2[%c0, %c0_1] : memref<16x128xf32, #tpu.memory_space<vmem>>, vector<16x128xf32>
    %c0_2 = arith.constant 0 : index
    %c0_3 = arith.constant 0 : index
    %4 = vector.load %arg3[%c0_2, %c0_3] : memref<16x128xf32, #tpu.memory_space<vmem>>, vector<16x128xf32>
    %5 = arith.negf %3 : vector<16x128xf32>
    %6 = math.exp %5 : vector<16x128xf32>
    %cst = arith.constant 1.000000e+00 : f32
    %7 = vector.broadcast %cst : f32 to vector<16x128xf32>
    %8 = arith.addf %7, %6 : vector<16x128xf32>
    %9 = arith.divf %7, %8 : vector<16x128xf32>
    %c0_4 = arith.constant 0 : index
    %c0_5 = arith.constant 0 : index
    %c0_6 = arith.constant 0 : index
    %c0_7 = arith.constant 0 : index
    %10 = vector.load %arg4[%c0_4, %c0_5, %c0_6, %c0_7] : memref<1x3x8x128xf32, #tpu.memory_space<vmem>>, vector<1x1x8x128xf32>
    %11 = vector.shape_cast %10 : vector<1x1x8x128xf32> to vector<8x128xf32>
    %12 = arith.mulf %9, %4 : vector<16x128xf32>
    %13 = vector.shape_cast %12 : vector<16x128xf32> to vector<2x8x128xf32>
    %cst_8 = arith.constant dense<0.000000e+00> : vector<8x128xf32>
    %14 = vector.multi_reduction <add>, %13, %cst_8 [0] : vector<2x8x128xf32> to vector<8x128xf32>
    %15 = arith.addf %11, %14 : vector<8x128xf32>
    %c0_9 = arith.constant 0 : index
    %c0_10 = arith.constant 0 : index
    %c0_11 = arith.constant 0 : index
    %c0_12 = arith.constant 0 : index
    %16 = vector.load %arg4[%c0_9, %c0_10, %c0_11, %c0_12] : memref<1x3x8x128xf32, #tpu.memory_space<vmem>>, vector<1x1x8x128xf32>
    %17 = vector.shape_cast %16 : vector<1x1x8x128xf32> to vector<8x128xf32>
    %18 = vector.shape_cast %15 : vector<8x128xf32> to vector<1x1x8x128xf32>
    tpu.vector_store %arg4[%c0_9, %c0_10, %c0_11, %c0_12], %18 {strides = array<i32>} : memref<1x3x8x128xf32, #tpu.memory_space<vmem>>, vector<1x1x8x128xf32>,
    %c0_13 = arith.constant 0 : index
    %c1 = arith.constant 1 : index
    %c0_14 = arith.constant 0 : index
    %c0_15 = arith.constant 0 : index
    %19 = vector.load %arg4[%c0_13, %c1, %c0_14, %c0_15] : memref<1x3x8x128xf32, #tpu.memory_space<vmem>>, vector<1x1x8x128xf32>
    %20 = vector.shape_cast %19 : vector<1x1x8x128xf32> to vector<8x128xf32>
    %21 = vector.shape_cast %9 : vector<16x128xf32> to vector<2x8x128xf32>
    %cst_16 = arith.constant dense<0.000000e+00> : vector<8x128xf32>
    %22 = vector.multi_reduction <add>, %21, %cst_16 [0] : vector<2x8x128xf32> to vector<8x128xf32>
    %23 = arith.addf %20, %22 : vector<8x128xf32>
    %c0_17 = arith.constant 0 : index
    %c1_18 = arith.constant 1 : index
    %c0_19 = arith.constant 0 : index
    %c0_20 = arith.constant 0 : index
    %24 = vector.load %arg4[%c0_17, %c1_18, %c0_19, %c0_20] : memref<1x3x8x128xf32, #tpu.memory_space<vmem>>, vector<1x1x8x128xf32>
    %25 = vector.shape_cast %24 : vector<1x1x8x128xf32> to vector<8x128xf32>
    %26 = vector.shape_cast %23 : vector<8x128xf32> to vector<1x1x8x128xf32>
    tpu.vector_store %arg4[%c0_17, %c1_18, %c0_19, %c0_20], %26 {strides = array<i32>} : memref<1x3x8x128xf32, #tpu.memory_space<vmem>>, vector<1x1x8x128xf32>,
    %c0_21 = arith.constant 0 : index
    %c2 = arith.constant 2 : index
    %c0_22 = arith.constant 0 : index
    %c0_23 = arith.constant 0 : index
    %27 = vector.load %arg4[%c0_21, %c2, %c0_22, %c0_23] : memref<1x3x8x128xf32, #tpu.memory_space<vmem>>, vector<1x1x8x128xf32>
    %28 = vector.shape_cast %27 : vector<1x1x8x128xf32> to vector<8x128xf32>
    %29 = vector.shape_cast %4 : vector<16x128xf32> to vector<2x8x128xf32>
    %cst_24 = arith.constant dense<0.000000e+00> : vector<8x128xf32>
    %30 = vector.multi_reduction <add>, %29, %cst_24 [0] : vector<2x8x128xf32> to vector<8x128xf32>
    %31 = arith.addf %28, %30 : vector<8x128xf32>
    %c0_25 = arith.constant 0 : index
    %c2_26 = arith.constant 2 : index
    %c0_27 = arith.constant 0 : index
    %c0_28 = arith.constant 0 : index
    %32 = vector.load %arg4[%c0_25, %c2_26, %c0_27, %c0_28] : memref<1x3x8x128xf32, #tpu.memory_space<vmem>>, vector<1x1x8x128xf32>
    %33 = vector.shape_cast %32 : vector<1x1x8x128xf32> to vector<8x128xf32>
    %34 = vector.shape_cast %31 : vector<8x128xf32> to vector<1x1x8x128xf32>
    tpu.vector_store %arg4[%c0_25, %c2_26, %c0_27, %c0_28], %34 {strides = array<i32>} : memref<1x3x8x128xf32, #tpu.memory_space<vmem>>, vector<1x1x8x128xf32>,
    return
  }
  func.func @transform_0(%arg0: i32, %arg1: i32) -> (i32, i32) {
    %c1_i32 = arith.constant 1 : i32
    %0 = arith.muli %arg0, %c1_i32 : i32
    %1 = arith.addi %0, %arg1 : i32
    %c0_i32 = arith.constant 0 : i32
    %2 = arith.minsi %1, %c0_i32 : i32
    %c0_i32_0 = arith.constant 0 : i32
    %c0_i32_1 = arith.constant 0 : i32
    return %2, %c0_i32_0 : i32, i32
  }
  func.func @transform_1(%arg0: i32, %arg1: i32) -> (i32, i32) {
    %c1_i32 = arith.constant 1 : i32
    %0 = arith.muli %arg0, %c1_i32 : i32
    %1 = arith.addi %0, %arg1 : i32
    %c0_i32 = arith.constant 0 : i32
    %2 = arith.minsi %1, %c0_i32 : i32
    %c0_i32_0 = arith.constant 0 : i32
    %c0_i32_1 = arith.constant 0 : i32
    return %2, %c0_i32_0 : i32, i32
  }
  func.func @transform_2(%arg0: i32, %arg1: i32) -> (i32, i32, i32, i32) {
    %c0_i32 = arith.constant 0 : i32
    %c0_i32_0 = arith.constant 0 : i32
    %c0_i32_1 = arith.constant 0 : i32
    %c0_i32_2 = arith.constant 0 : i32
    return %arg0, %c0_i32, %c0_i32_0, %c0_i32_1 : i32, i32, i32, i32
  }
}

</mosaic_0001>

<llo_original>
// kernel: tpu_custom_call.1
$region0: #{tpu_custom_call.1}
  #allocation0 [shape = 'u32[]', space=smem, size = 0x4, offset = 0x4, fixed_abs, tag = 'smem constant byte address 0x4 - core index']
  #allocation1 [shape = 'u32[144,128]{1,0:T(1,128)}', space=vmem, size = 0x12000, scoped, tag = 'internal scratch']
  %s0 = inlined_call_operand.hbm [shape: f32[16,128], index: 0, kind: input, shape index: {}]
  %s1 = inlined_call_operand.hbm [shape: f32[16,128], index: 1, kind: input, shape index: {}]
  %s2 = inlined_call_operand.hbm [shape: f32[1,3,8,128], index: 2, kind: output, shape index: {}]
  %s3 = sld [smem:[#allocation0]]
  $region30: #{tpu_custom_call.1} parent=0
    _
  %s5 = ssub.s32 1, %s3
  %s6 = scalar_select 0, %s5, %s3
  $region1: #{tpu_custom_call.1} parent=0
    #allocation2 [shape = 'u8[8192]{0}', space=vmem, size = 0x2000, scoped, tag = 'input window, operand 0, single buffered']
    #allocation3 [shape = 's32[1]{0}', space=sflag, size = 0x4, scoped, tag = 'scoped memory for tpu_custom_call.1']
    #allocation4 [shape = 's32[1]{0}', space=sflag, size = 0x4, scoped, tag = 'scoped memory for tpu_custom_call.1']
    #allocation5 [shape = 'u8[8192]{0}', space=vmem, size = 0x2000, scoped, tag = 'input window, operand 1, single buffered']
    #allocation6 [shape = 's32[1]{0}', space=sflag, size = 0x4, scoped, tag = 'scoped memory for tpu_custom_call.1']
    #allocation7 [shape = 'u8[12288]{0}', space=vmem, size = 0x3000, scoped, tag = 'output window, operand 0, single buffered']
    %7 = vsyncpa [#allocation3], 0
    %8 = vsyncpa [#allocation6], 0
    %9 = vsyncpa [#allocation4], 0
    // Predicated region
    $region2: #{tpu_custom_call.1} parent=1 // pred_check
      _
    $region3: #{tpu_custom_call.1} parent=1 // pred_check_branch
      %11 = sbr.rel (0) target = $region5
    $region4: #{tpu_custom_call.1} parent=1 // pred_region
      %s12 = sadd.s32 0, 0
      %p13 = scmp.lt.s32.totalorder %s12, 0
      %s14 = scalar_select %p13, %s12, 0
      %s15 = smul.u32 2, %s14
      %s17 = ssub.s32 256, 256
      %18 = vsyncadd [#allocation3], %s17
      %s19 = smul.addr %s15, 128
      %s20 = scalar_lea.hbm %s0, %s19
      %s21 = sshll.u32 [#allocation2], 4
      %s22 = int_to_ptr.vmem [resolvable:$true] %s21
      %27 = dma.hbm_to_vmem [thread:$0]  %s20, 256, %s22, [#allocation3], 128, 128, 8
    $region5: #{tpu_custom_call.1} parent=1 // pred_fallthru
      _
    // Predicated region
    $region6: #{tpu_custom_call.1} parent=1 // pred_check
      _
    $region7: #{tpu_custom_call.1} parent=1 // pred_check_branch
      %29 = sbr.rel (0) target = $region9
    $region8: #{tpu_custom_call.1} parent=1 // pred_region
      %s30 = sadd.s32 0, 0
      %p31 = scmp.lt.s32.totalorder %s30, 0
      %s32 = scalar_select %p31, %s30, 0
      %s33 = smul.u32 2, %s32
      %s35 = ssub.s32 256, 256
      %36 = vsyncadd [#allocation6], %s35
      %s37 = smul.addr %s33, 128
      %s38 = scalar_lea.hbm %s1, %s37
      %s39 = sshll.u32 [#allocation5], 4
      %s40 = int_to_ptr.vmem [resolvable:$true] %s39
      %45 = dma.hbm_to_vmem [thread:$0]  %s38, 256, %s40, [#allocation6], 128, 128, 8
    $region9: #{tpu_custom_call.1} parent=1 // pred_fallthru
      _
    // Predicated region
    $region10: #{tpu_custom_call.1} parent=1 // pred_check
      _
    $region11: #{tpu_custom_call.1} parent=1 // pred_check_branch
      %47 = sbr.rel (0) target = $region13
    $region12: #{tpu_custom_call.1} parent=1 // pred_region
      %48 = dma.done [#allocation3], 256
    $region13: #{tpu_custom_call.1} parent=1 // pred_fallthru
      _
    // Predicated region
    $region14: #{tpu_custom_call.1} parent=1 // pred_check
      _
    $region15: #{tpu_custom_call.1} parent=1 // pred_check_branch
      %50 = sbr.rel (0) target = $region17
    $region16: #{tpu_custom_call.1} parent=1 // pred_region
      %51 = dma.done [#allocation6], 256
    $region17: #{tpu_custom_call.1} parent=1 // pred_fallthru
      _
    %s52 = sadd.s32 0, 0
    %p53 = scmp.lt.s32.totalorder %s52, 0
    %s54 = scalar_select %p53, %s52, 0
    %s55 = smul.u32 2, %s54
    %s56 = sadd.s32 0, 0
    %p57 = scmp.lt.s32.totalorder %s56, 0
    %s58 = scalar_select %p57, %s56, 0
    %s59 = smul.u32 2, %s58
    %p60 = scmp.eq.s32.totalorder 0, 0
    // Predicated region
    $region18: #{tpu_custom_call.1} parent=1 // pred_check
      %p61 = pneg %p60
    $region19: #{tpu_custom_call.1} parent=1 // pred_check_branch
      %63 = sbr.rel (%p61) target = $region21
    $region20: #{tpu_custom_call.1} parent=1 // pred_region
      %64 = vst [vmem:[#allocation7] sm:$0xff] 0.0
      %65 = vst [vmem:[#allocation7 + $0x8] sm:$0xff] 0.0
      %66 = vst [vmem:[#allocation7 + $0x10] sm:$0xff] 0.0
    $region21: #{tpu_custom_call.1} parent=1 // pred_fallthru
      _
    %v67 = vld [vmem:[#allocation2] sm:$0xff]
    %v68 = vld [vmem:[#allocation2 + $0x8] sm:$0xff]
    %v69 = vld [vmem:[#allocation5] sm:$0xff]
    %v70 = vld [vmem:[#allocation5 + $0x8] sm:$0xff]
    %v71 = vxor.u32 %v67, 2147483648
    %v72 = vxor.u32 %v68, 2147483648
    %v73 = vmul.f32 %v71, 1.442695
    %v74 = vpow.pop %v73
    %v75 = vmul.f32 %v72, 1.442695
    %v76 = vpow.pop %v75
    %v77 = vadd.f32 %v74, 1.0
    %v78 = vadd.f32 %v76, 1.0
    %v79 = vrcp.pop %v77
    %v80 = vmul.f32 1.0, %v79
    %v81 = vrcp.pop %v78
    %v82 = vmul.f32 1.0, %v81
    %v83 = vld [vmem:[#allocation7] sm:$0xff]
    %v84 = vmul.f32 %v80, %v69
    %v85 = vmul.f32 %v82, %v70
    %v86 = vadd.f32 %v84, %v85
    %v87 = vadd.f32 %v83, %v86
    %88 = vst [vmem:[#allocation7] sm:$0xff] %v87
    %s89 = scalar_lea.vmem [#allocation7], 8
    %v90 = vld [vmem:[%s89] sm:$0xff]
    %v91 = vadd.f32 %v80, %v82
    %v92 = vadd.f32 %v90, %v91
    %93 = vst [vmem:[%s89] sm:$0xff] %v92
    %s94 = scalar_lea.vmem [#allocation7], 16
    %v95 = vld [vmem:[%s94] sm:$0xff]
    %v96 = vadd.f32 %v69, %v70
    %v97 = vadd.f32 %v95, %v96
    %98 = vst [vmem:[%s94] sm:$0xff] %v97
    // Predicated region
    $region22: #{tpu_custom_call.1} parent=1 // pred_check
      _
    $region23: #{tpu_custom_call.1} parent=1 // pred_check_branch
      %100 = sbr.rel (0) target = $region25
    $region24: #{tpu_custom_call.1} parent=1 // pred_region
      %s102 = ssub.s32 384, 384
      %103 = vsyncadd [#allocation4], %s102
      %s104 = sshll.u32 [#allocation7], 4
      %s105 = int_to_ptr.vmem [resolvable:$true] %s104
      %110 = dma.vmem_to_hbm [thread:$0]  %s105, 384, %s2, [#allocation4], 128, 128, 8
    $region25: #{tpu_custom_call.1} parent=1 // pred_fallthru
      _
    // Predicated region
    $region26: #{tpu_custom_call.1} parent=1 // pred_check
      _
    $region27: #{tpu_custom_call.1} parent=1 // pred_check_branch
      %112 = sbr.rel (0) target = $region29
    $region28: #{tpu_custom_call.1} parent=1 // pred_region
      %113 = dma.done [#allocation4], 384
    $region29: #{tpu_custom_call.1} parent=1 // pred_fallthru
      _
    %114 = vsyncpa [#allocation3], 1
    %115 = vsyncpa [#allocation6], 1
    %116 = vsyncpa [#allocation4], 1

</llo_original>
